<compile_context>
chip_gen: v7x
topology: tpu7x:2x2x1
jax: 0.10.0
libtpu: 0.0.40
codegen_flags: <defaults>
</compile_context>

<pallas_src>
import jax
import jax.numpy as jnp
from jax.experimental import pallas as pl
from jax.experimental.pallas import tpu as pltpu


def _mapping_proxy_kernel(x_ref, mean_ref, std_ref, o_ref):
    # x_ref / o_ref: (bb, L, D); mean_ref / std_ref: (L, D).
    x = x_ref[...]
    y = std_ref[...][None, :, :] * x + mean_ref[...][None, :, :]
    # LeakyReLU(0.2): for slope in (0, 1), max(y, 0.2*y) == leaky_relu(y).
    o_ref[...] = jnp.maximum(y, 0.2 * y)


def _choose_batches_per_block(B, L, D, itemsize, target_block_bytes=4 << 20):
    """Pick bb (batch elements per block) so one block is ~target_block_bytes.

    No divisibility requirement on B: the grid uses cdiv and Pallas pads /
    masks the final partial block. Block offsets remain whole batch elements,
    so the (L, D) parameters line up with every block.
    """
    bytes_per_batch = L * D * itemsize
    bb = max(1, min(B, target_block_bytes // max(1, bytes_per_batch)))
    # TODO(synk): if a *single* batch element (L*D) ever exceeds ~12 MiB, split
    # along L as well; those shapes do not occur for this module.
    return int(bb)


def mapping_proxy(x, mean, std):
    """x: (B, L, D); mean, std: (L, D) -> (B, L, D). y = lrelu_{0.2}(std*x+mean)."""
    B, L, D = x.shape
    assert mean.shape == (L, D) and std.shape == (L, D)
    mean = mean.astype(x.dtype)
    std = std.astype(x.dtype)

    itemsize = x.dtype.itemsize
    bb = _choose_batches_per_block(B, L, D, itemsize)
    n_blocks = pl.cdiv(B, bb)

    block_bytes = bb * L * D * itemsize
    param_bytes = L * D * itemsize

    # Explicit accounting: double-buffered x + double-buffered out + both
    # params (assume worst-case double-buffered too) + ~2 MiB headroom.
    # With the 4 MiB block target this stays ~20 MiB, inside every
    # generation's scoped-VMEM budget (v7x: 64 MiB physical).
    vmem_limit = int(max(16 << 20,
                         4 * block_bytes + 4 * param_bytes + (2 << 20)))

    # TODO(synk): if D is ever small / not a multiple of 128, flatten feature
    # dims to keep the lane axis dense (avoids masked partial stores).
    out = pl.pallas_call(
        _mapping_proxy_kernel,
        out_shape=jax.ShapeDtypeStruct((B, L, D), x.dtype),
        grid=(n_blocks,),
        in_specs=[
            pl.BlockSpec((bb, L, D), lambda i: (i, 0, 0)),
            pl.BlockSpec((L, D), lambda i: (0, 0)),   # VMEM-resident params
            pl.BlockSpec((L, D), lambda i: (0, 0)),   # VMEM-resident params
        ],
        out_specs=pl.BlockSpec((bb, L, D), lambda i: (i, 0, 0)),
        compiler_params=pltpu.CompilerParams(
            dimension_semantics=("parallel",),
            vmem_limit_bytes=vmem_limit,
        ),
    )(x, mean, std)

    return out


def mapping_proxy_ref(x, mean, std):
    y = std[None, :, :] * x + mean[None, :, :]
    return jnp.where(y >= 0, y, 0.2 * y)


if __name__ == "__main__":
    key = jax.random.PRNGKey(0)
    kx, km, ks = jax.random.split(key, 3)

    B, L, D = 2, 8, 512  # small StyleGAN-like latent shapes
    x = jax.random.normal(kx, (B, L, D), dtype=jnp.float32)
    # Deterministic synthetic "gaussian_ft" parameters (mean / std of the fit).
    mean = 0.1 * jax.random.normal(km, (L, D), dtype=jnp.float32)
    std = 1.0 + 0.05 * jax.random.normal(ks, (L, D), dtype=jnp.float32)

    out = mapping_proxy(x, mean, std)
    jax.block_until_ready(out)

    ref = mapping_proxy_ref(x, mean, std)
    assert out.shape == (B, L, D)
    assert jnp.allclose(out, ref, atol=1e-6, rtol=1e-6)

    # Also exercise an awkward (prime) batch size so the padded last block
    # path (cdiv grid, no divisibility requirement) is covered.
    B2 = 7
    x2 = jax.random.normal(kx, (B2, L, D), dtype=jnp.float32)
    out2 = mapping_proxy(x2, mean, std)
    jax.block_until_ready(out2)
    assert jnp.allclose(out2, mapping_proxy_ref(x2, mean, std),
                        atol=1e-6, rtol=1e-6)

    print("KERNEL_OK")
</pallas_src>

<mosaic_0001>
module attributes {stable_mosaic.version = 11 : i64} {
  func.func @_mapping_proxy_kernel(%arg0: i32, %arg1: memref<2x8x512xf32, #tpu.memory_space<vmem>>, %arg2: memref<8x512xf32, #tpu.memory_space<vmem>>, %arg3: memref<8x512xf32, #tpu.memory_space<vmem>>, %arg4: memref<2x8x512xf32, #tpu.memory_space<vmem>>) attributes {dimension_semantics = [#tpu.dimension_semantics<parallel>], iteration_bounds = array<i64: 1>, scalar_prefetch = 0 : i64, scratch_operands = 0 : i64, tpu.core_type = #tpu.core_type<tc>, window_params = [{transform_indices = @transform_0, window_bounds = array<i64: 2, 8, 512>}, {pipeline_mode = #tpu.pipeline_mode<synchronous>, transform_indices = @transform_1, window_bounds = array<i64: 8, 512>}, {pipeline_mode = #tpu.pipeline_mode<synchronous>, transform_indices = @transform_2, window_bounds = array<i64: 8, 512>}, {transform_indices = @transform_3, window_bounds = array<i64: 2, 8, 512>}]} {
    %c0 = arith.constant 0 : index
    %c0_0 = arith.constant 0 : index
    %c0_1 = arith.constant 0 : index
    %0 = vector.load %arg1[%c0, %c0_0, %c0_1] : memref<2x8x512xf32, #tpu.memory_space<vmem>>, vector<2x8x512xf32>
    %c0_2 = arith.constant 0 : index
    %c0_3 = arith.constant 0 : index
    %1 = vector.load %arg3[%c0_2, %c0_3] : memref<8x512xf32, #tpu.memory_space<vmem>>, vector<8x512xf32>
    %2 = vector.shape_cast %1 : vector<8x512xf32> to vector<1x8x512xf32>
    %3 = vector.broadcast %2 : vector<1x8x512xf32> to vector<2x8x512xf32>
    %4 = arith.mulf %3, %0 : vector<2x8x512xf32>
    %c0_4 = arith.constant 0 : index
    %c0_5 = arith.constant 0 : index
    %5 = vector.load %arg2[%c0_4, %c0_5] : memref<8x512xf32, #tpu.memory_space<vmem>>, vector<8x512xf32>
    %6 = vector.shape_cast %5 : vector<8x512xf32> to vector<1x8x512xf32>
    %7 = vector.broadcast %6 : vector<1x8x512xf32> to vector<2x8x512xf32>
    %8 = arith.addf %4, %7 : vector<2x8x512xf32>
    %cst = arith.constant 2.000000e-01 : f32
    %9 = vector.broadcast %cst : f32 to vector<2x8x512xf32>
    %10 = arith.mulf %9, %8 : vector<2x8x512xf32>
    %11 = arith.maximumf %8, %10 : vector<2x8x512xf32>
    %c0_6 = arith.constant 0 : index
    %c0_7 = arith.constant 0 : index
    %c0_8 = arith.constant 0 : index
    %12 = vector.load %arg4[%c0_6, %c0_7, %c0_8] : memref<2x8x512xf32, #tpu.memory_space<vmem>>, vector<2x8x512xf32>
    tpu.vector_store %arg4[%c0_6, %c0_7, %c0_8], %11 {strides = array<i32>} : memref<2x8x512xf32, #tpu.memory_space<vmem>>, vector<2x8x512xf32>,
    return
  }
  func.func @transform_0(%arg0: i32) -> (i32, i32, i32) {
    %c0_i32 = arith.constant 0 : i32
    %c0_i32_0 = arith.constant 0 : i32
    %c0_i32_1 = arith.constant 0 : i32
    return %arg0, %c0_i32, %c0_i32_0 : i32, i32, i32
  }
  func.func @transform_1(%arg0: i32) -> (i32, i32) {
    %c0_i32 = arith.constant 0 : i32
    %c0_i32_0 = arith.constant 0 : i32
    %c0_i32_1 = arith.constant 0 : i32
    return %c0_i32, %c0_i32_0 : i32, i32
  }
  func.func @transform_2(%arg0: i32) -> (i32, i32) {
    %c0_i32 = arith.constant 0 : i32
    %c0_i32_0 = arith.constant 0 : i32
    %c0_i32_1 = arith.constant 0 : i32
    return %c0_i32, %c0_i32_0 : i32, i32
  }
  func.func @transform_3(%arg0: i32) -> (i32, i32, i32) {
    %c0_i32 = arith.constant 0 : i32
    %c0_i32_0 = arith.constant 0 : i32
    %c0_i32_1 = arith.constant 0 : i32
    return %arg0, %c0_i32, %c0_i32_0 : i32, i32, i32
  }
}

</mosaic_0001>

<llo_original>
// kernel: tpu_custom_call.1
$region0: #{tpu_custom_call.1}
  #allocation0 [shape = 'u32[]', space=smem, size = 0x4, offset = 0x4, fixed_abs, tag = 'smem constant byte address 0x4 - core index']
  #allocation1 [shape = 'u32[144,128]{1,0:T(1,128)}', space=vmem, size = 0x12000, scoped, tag = 'internal scratch']
  %s0 = inlined_call_operand.hbm [shape: f32[2,8,512], index: 0, kind: input, shape index: {}]
  %s1 = inlined_call_operand.hbm [shape: f32[8,512], index: 1, kind: input, shape index: {}]
  %s2 = inlined_call_operand.hbm [shape: f32[8,512], index: 2, kind: input, shape index: {}]
  %s3 = inlined_call_operand.hbm [shape: f32[2,8,512], index: 3, kind: output, shape index: {}]
  %s4 = sld [smem:[#allocation0]]
  $region34: #{tpu_custom_call.1} parent=0
    _
  %s6 = ssub.s32 1, %s4
  %s7 = scalar_select 0, %s6, %s4
  $region1: #{tpu_custom_call.1} parent=0
    #allocation2 [shape = 'u8[32768]{0}', space=vmem, size = 0x8000, scoped, tag = 'input window, operand 0, single buffered']
    #allocation3 [shape = 's32[1]{0}', space=sflag, size = 0x4, scoped, tag = 'scoped memory for tpu_custom_call.1']
    #allocation4 [shape = 's32[1]{0}', space=sflag, size = 0x4, scoped, tag = 'scoped memory for tpu_custom_call.1']
    #allocation5 [shape = 'u8[16384]{0}', space=vmem, size = 0x4000, scoped, tag = 'input window, operand 1, single buffered']
    #allocation6 [shape = 's32[1]{0}', space=sflag, size = 0x4, scoped, tag = 'scoped memory for tpu_custom_call.1']
    #allocation7 [shape = 'u8[16384]{0}', space=vmem, size = 0x4000, scoped, tag = 'input window, operand 2, single buffered']
    #allocation8 [shape = 'u8[32768]{0}', space=vmem, size = 0x8000, scoped, tag = 'output window, operand 0, single buffered']
    %8 = vsyncpa [#allocation3], 0
    %9 = vsyncpa [#allocation6], 0
    %10 = vsyncpa [#allocation4], 0
    // Predicated region
    $region2: #{tpu_custom_call.1} parent=1 // pred_check
      _
    $region3: #{tpu_custom_call.1} parent=1 // pred_check_branch
      %12 = sbr.rel (0) target = $region5
    $region4: #{tpu_custom_call.1} parent=1 // pred_region
      %s14 = ssub.s32 1024, 1024
      %15 = vsyncadd [#allocation3], %s14
      %s16 = sshll.u32 [#allocation2], 4
      %s17 = int_to_ptr.vmem [resolvable:$true] %s16
      %22 = dma.hbm_to_vmem [thread:$0]  %s0, 1024, %s17, [#allocation3], 512, 512, 32
    $region5: #{tpu_custom_call.1} parent=1 // pred_fallthru
      _
    // Predicated region
    $region6: #{tpu_custom_call.1} parent=1 // pred_check
      _
    $region7: #{tpu_custom_call.1} parent=1 // pred_check_branch
      %24 = sbr.rel (0) target = $region9
    $region8: #{tpu_custom_call.1} parent=1 // pred_region
      %s26 = ssub.s32 512, 512
      %27 = vsyncadd [#allocation6], %s26
      %s29 = sshll.u32 [#allocation5], 4
      %s30 = int_to_ptr.vmem [resolvable:$true] %s29
      %32 = dma.hbm_to_vmem [thread:$0]  %s1, 512, %s30, [#allocation6]
    $region9: #{tpu_custom_call.1} parent=1 // pred_fallthru
      _
    // Predicated region
    $region10: #{tpu_custom_call.1} parent=1 // pred_check
      _
    $region11: #{tpu_custom_call.1} parent=1 // pred_check_branch
      %34 = sbr.rel (0) target = $region13
    $region12: #{tpu_custom_call.1} parent=1 // pred_region
      %s36 = ssub.s32 512, 512
      %37 = vsyncadd [#allocation6], %s36
      %s39 = sshll.u32 [#allocation7], 4
      %s40 = int_to_ptr.vmem [resolvable:$true] %s39
      %42 = dma.hbm_to_vmem [thread:$0]  %s2, 512, %s40, [#allocation6]
    $region13: #{tpu_custom_call.1} parent=1 // pred_fallthru
      _
    // Predicated region
    $region14: #{tpu_custom_call.1} parent=1 // pred_check
      _
    $region15: #{tpu_custom_call.1} parent=1 // pred_check_branch
      %44 = sbr.rel (0) target = $region17
    $region16: #{tpu_custom_call.1} parent=1 // pred_region
      %45 = dma.done [#allocation3], 1024
    $region17: #{tpu_custom_call.1} parent=1 // pred_fallthru
      _
    // Predicated region
    $region18: #{tpu_custom_call.1} parent=1 // pred_check
      _
    $region19: #{tpu_custom_call.1} parent=1 // pred_check_branch
      %47 = sbr.rel (0) target = $region21
    $region20: #{tpu_custom_call.1} parent=1 // pred_region
      %48 = dma.done [#allocation6], 512
    $region21: #{tpu_custom_call.1} parent=1 // pred_fallthru
      _
    // Predicated region
    $region22: #{tpu_custom_call.1} parent=1 // pred_check
      _
    $region23: #{tpu_custom_call.1} parent=1 // pred_check_branch
      %50 = sbr.rel (0) target = $region25
    $region24: #{tpu_custom_call.1} parent=1 // pred_region
      %51 = dma.done [#allocation6], 512
    $region25: #{tpu_custom_call.1} parent=1 // pred_fallthru
      _
    %v52 = vld [vmem:[#allocation2] sm:$0xff]
    %v53 = vld [vmem:[#allocation2 + $0x8] sm:$0xff]
    %v54 = vld [vmem:[#allocation2 + $0x10] sm:$0xff]
    %v55 = vld [vmem:[#allocation2 + $0x18] sm:$0xff]
    %v56 = vld [vmem:[#allocation2 + $0x20] sm:$0xff]
    %v57 = vld [vmem:[#allocation2 + $0x28] sm:$0xff]
    %v58 = vld [vmem:[#allocation2 + $0x30] sm:$0xff]
    %v59 = vld [vmem:[#allocation2 + $0x38] sm:$0xff]
    %v60 = vld [vmem:[#allocation7] sm:$0xff]
    %v61 = vld [vmem:[#allocation7 + $0x8] sm:$0xff]
    %v62 = vld [vmem:[#allocation7 + $0x10] sm:$0xff]
    %v63 = vld [vmem:[#allocation7 + $0x18] sm:$0xff]
    %v64 = vmul.f32 %v60, %v52
    %v65 = vmul.f32 %v61, %v53
    %v66 = vmul.f32 %v62, %v54
    %v67 = vmul.f32 %v63, %v55
    %v68 = vmul.f32 %v60, %v56
    %v69 = vmul.f32 %v61, %v57
    %v70 = vmul.f32 %v62, %v58
    %v71 = vmul.f32 %v63, %v59
    %v72 = vld [vmem:[#allocation5] sm:$0xff]
    %v73 = vld [vmem:[#allocation5 + $0x8] sm:$0xff]
    %v74 = vld [vmem:[#allocation5 + $0x10] sm:$0xff]
    %v75 = vld [vmem:[#allocation5 + $0x18] sm:$0xff]
    %v76 = vadd.f32 %v64, %v72
    %v77 = vadd.f32 %v65, %v73
    %v78 = vadd.f32 %v66, %v74
    %v79 = vadd.f32 %v67, %v75
    %v80 = vadd.f32 %v68, %v72
    %v81 = vadd.f32 %v69, %v73
    %v82 = vadd.f32 %v70, %v74
    %v83 = vadd.f32 %v71, %v75
    %v84 = vmul.f32 %v76, 0.2
    %v85 = vmul.f32 %v77, 0.2
    %v86 = vmul.f32 %v78, 0.2
    %v87 = vmul.f32 %v79, 0.2
    %v88 = vmul.f32 %v80, 0.2
    %v89 = vmul.f32 %v81, 0.2
    %v90 = vmul.f32 %v82, 0.2
    %v91 = vmul.f32 %v83, 0.2
    %v92 = vmax.f32 %v76, %v84
    %v93 = vmax.f32 %v77, %v85
    %v94 = vmax.f32 %v78, %v86
    %v95 = vmax.f32 %v79, %v87
    %v96 = vmax.f32 %v80, %v88
    %v97 = vmax.f32 %v81, %v89
    %v98 = vmax.f32 %v82, %v90
    %v99 = vmax.f32 %v83, %v91
    %100 = vst [vmem:[#allocation8] sm:$0xff] %v92
    %101 = vst [vmem:[#allocation8 + $0x8] sm:$0xff] %v93
    %102 = vst [vmem:[#allocation8 + $0x10] sm:$0xff] %v94
    %103 = vst [vmem:[#allocation8 + $0x18] sm:$0xff] %v95
    %104 = vst [vmem:[#allocation8 + $0x20] sm:$0xff] %v96
    %105 = vst [vmem:[#allocation8 + $0x28] sm:$0xff] %v97
    %106 = vst [vmem:[#allocation8 + $0x30] sm:$0xff] %v98
    %107 = vst [vmem:[#allocation8 + $0x38] sm:$0xff] %v99
    // Predicated region
    $region26: #{tpu_custom_call.1} parent=1 // pred_check
      _
    $region27: #{tpu_custom_call.1} parent=1 // pred_check_branch
      %109 = sbr.rel (0) target = $region29
    $region28: #{tpu_custom_call.1} parent=1 // pred_region
      %s111 = ssub.s32 1024, 1024
      %112 = vsyncadd [#allocation4], %s111
      %s113 = sshll.u32 [#allocation8], 4
      %s114 = int_to_ptr.vmem [resolvable:$true] %s113
      %119 = dma.vmem_to_hbm [thread:$0]  %s114, 1024, %s3, [#allocation4], 512, 512, 32
    $region29: #{tpu_custom_call.1} parent=1 // pred_fallthru
      _
    // Predicated region
    $region30: #{tpu_custom_call.1} parent=1 // pred_check
      _
    $region31: #{tpu_custom_call.1} parent=1 // pred_check_branch
      %121 = sbr.rel (0) target = $region33
    $region32: #{tpu_custom_call.1} parent=1 // pred_region
      %122 = dma.done [#allocation4], 1024
    $region33: #{tpu_custom_call.1} parent=1 // pred_fallthru
      _
    %123 = vsyncpa [#allocation3], 1
    %124 = vsyncpa [#allocation6], 1
    %125 = vsyncpa [#allocation4], 1

</llo_original>
